<compile_context>
chip_gen: v7x
topology: tpu7x:2x2x1
jax: 0.10.0
libtpu: 0.0.40
codegen_flags: <defaults>
</compile_context>

<pallas_src>
import functools

import jax
import jax.numpy as jnp
from jax.experimental import pallas as pl
from jax.experimental.pallas import tpu as pltpu


def _round_up(x, m):
    return ((x + m - 1) // m) * m


def _mlp_fused_kernel(x_ref, *refs, num_layers):
    """All Linear(+ReLU) stages fused on one (tm, *) tile.

    x_ref : (tm, K)           matmul-operand dtype (bf16 or f32)
    refs  : w0, b0, ..., w_{L-1}, b_{L-1}, o_ref
            w_i : (K_i, N_i)  same dtype as x_ref (MXU operand)
            b_i : (1, N_i)    float32
    o_ref : (tm, N_pad)       lane-dense (N_pad multiple of 128)
    """
    o_ref = refs[-1]
    h = x_ref[...].astype(jnp.float32)
    for i in range(num_layers):
        w_ref = refs[2 * i]
        b_ref = refs[2 * i + 1]
        y = jnp.dot(h.astype(w_ref.dtype), w_ref[...],
                    preferred_element_type=jnp.float32)
        y = y + b_ref[...].astype(jnp.float32)   # bias + ReLU in f32 (VPU)
        if i < num_layers - 1:
            y = jnp.maximum(y, 0.0)
        h = y
    o_ref[...] = h.astype(o_ref.dtype)


def mlp_forward(x, params, *, use_bf16_matmul=True, tm_max=512):
    """x: [..., input_dim]; params: list of (W[in,out], b[out])."""
    lead_shape = x.shape[:-1]
    x2d = x.reshape(-1, x.shape[-1])
    M, K = x2d.shape
    num_layers = len(params)
    output_dim = params[-1][1].shape[0]
    out_dtype = x.dtype

    mm_dtype = jnp.bfloat16 if use_bf16_matmul else jnp.float32

    # Lane-dense final store: pad last layer to a multiple of 128 columns.
    n_pad = _round_up(output_dim, 128)

    flat_wb = []
    for i, (w, b) in enumerate(params):
        if i == num_layers - 1 and w.shape[1] != n_pad:
            w = jnp.pad(w, ((0, 0), (0, n_pad - w.shape[1])))
            b = jnp.pad(b, (0, n_pad - b.shape[0]))
        flat_wb.append(w.astype(mm_dtype))                     # MXU operand
        flat_wb.append(b.astype(jnp.float32).reshape(1, -1))   # f32 bias

    # Tile M across the grid; weights stay resident (constant block index).
    tm = min(tm_max, _round_up(M, 8))
    m_pad = _round_up(M, tm)
    if m_pad != M:
        x2d = jnp.pad(x2d, ((0, m_pad - M), (0, 0)))
    x2d = x2d.astype(mm_dtype)

    in_specs = [pl.BlockSpec((tm, K), lambda i: (i, 0))]
    for a in flat_wb:
        in_specs.append(pl.BlockSpec(a.shape, lambda i: (0, 0)))

    kernel = functools.partial(_mlp_fused_kernel, num_layers=num_layers)
    out = pl.pallas_call(
        kernel,
        out_shape=jax.ShapeDtypeStruct((m_pad, n_pad), out_dtype),
        grid=(m_pad // tm,),
        in_specs=in_specs,
        out_specs=pl.BlockSpec((tm, n_pad), lambda i: (i, 0)),
        compiler_params=pltpu.CompilerParams(
            dimension_semantics=("parallel",),
            vmem_limit_bytes=32 * 1024 * 1024),
    )(x2d, *flat_wb)

    out = out[:M, :output_dim]
    return out.reshape(*lead_shape, output_dim)


def init_mlp_params(key, input_dim, hidden_dim, output_dim, num_layers,
                    dtype=jnp.float32):
    """Deterministic params mimicking nn.Linear default init (uniform ±1/sqrt(fan_in))."""
    h = [hidden_dim] * (num_layers - 1)
    dims_in = [input_dim] + h
    dims_out = h + [output_dim]
    params = []
    for n_in, n_out in zip(dims_in, dims_out):
        key, kw, kb = jax.random.split(key, 3)
        bound = 1.0 / (n_in ** 0.5)
        w = jax.random.uniform(kw, (n_in, n_out), dtype, -bound, bound)
        b = jax.random.uniform(kb, (n_out,), dtype, -bound, bound)
        params.append((w, b))
    return params


if __name__ == "__main__":
    key = jax.random.PRNGKey(0)
    kx, kp = jax.random.split(key)

    # DETR-like bbox head at small shapes.
    batch, num_queries = 2, 8
    input_dim, hidden_dim, output_dim, num_layers = 32, 64, 4, 3

    x = jax.random.normal(kx, (batch, num_queries, input_dim), jnp.float32)
    params = init_mlp_params(kp, input_dim, hidden_dim, output_dim, num_layers)

    out = mlp_forward(x, params)
    jax.block_until_ready(out)
    assert out.shape == (batch, num_queries, output_dim)

    # Reference 1: pure-f32 JAX (exact module semantics) — loose tol because the
    # kernel uses bf16 MXU operands (f32 accumulate).
    ref_f32 = x
    for i, (w, b) in enumerate(params):
        ref_f32 = ref_f32 @ w + b
        if i < num_layers - 1:
            ref_f32 = jnp.maximum(ref_f32, 0.0)
    assert jnp.allclose(out, ref_f32, atol=2e-2, rtol=2e-2)

    # Reference 2: JAX computing with the same bf16 operands / f32 accumulate.
    h = x.reshape(-1, input_dim).astype(jnp.float32)
    for i, (w, b) in enumerate(params):
        y = jnp.dot(h.astype(jnp.bfloat16), w.astype(jnp.bfloat16),
                    preferred_element_type=jnp.float32) + b
        h = jnp.maximum(y, 0.0) if i < num_layers - 1 else y
    ref_bf16 = h.reshape(batch, num_queries, output_dim)
    assert jnp.allclose(out, ref_bf16, atol=1e-3, rtol=1e-3)

    print("KERNEL_OK")
</pallas_src>

<mosaic_0001>
module attributes {stable_mosaic.version = 11 : i64} {
  func.func @_mlp_fused_kernel(%arg0: i32, %arg1: memref<16x32xbf16, #tpu.memory_space<vmem>>, %arg2: memref<32x64xbf16, #tpu.memory_space<vmem>>, %arg3: memref<1x64xf32, #tpu.memory_space<vmem>>, %arg4: memref<64x64xbf16, #tpu.memory_space<vmem>>, %arg5: memref<1x64xf32, #tpu.memory_space<vmem>>, %arg6: memref<64x128xbf16, #tpu.memory_space<vmem>>, %arg7: memref<1x128xf32, #tpu.memory_space<vmem>>, %arg8: memref<16x128xf32, #tpu.memory_space<vmem>>) attributes {dimension_semantics = [#tpu.dimension_semantics<parallel>], iteration_bounds = array<i64: 1>, scalar_prefetch = 0 : i64, scratch_operands = 0 : i64, tpu.core_type = #tpu.core_type<tc>, window_params = [{transform_indices = @transform_0, window_bounds = array<i64: 16, 32>}, {pipeline_mode = #tpu.pipeline_mode<synchronous>, transform_indices = @transform_1, window_bounds = array<i64: 32, 64>}, {pipeline_mode = #tpu.pipeline_mode<synchronous>, transform_indices = @transform_2, window_bounds = array<i64: 1, 64>}, {pipeline_mode = #tpu.pipeline_mode<synchronous>, transform_indices = @transform_3, window_bounds = array<i64: 64, 64>}, {pipeline_mode = #tpu.pipeline_mode<synchronous>, transform_indices = @transform_4, window_bounds = array<i64: 1, 64>}, {pipeline_mode = #tpu.pipeline_mode<synchronous>, transform_indices = @transform_5, window_bounds = array<i64: 64, 128>}, {pipeline_mode = #tpu.pipeline_mode<synchronous>, transform_indices = @transform_6, window_bounds = array<i64: 1, 128>}, {transform_indices = @transform_7, window_bounds = array<i64: 16, 128>}]} {
    %c0 = arith.constant 0 : index
    %c0_0 = arith.constant 0 : index
    %0 = vector.load %arg1[%c0, %c0_0] : memref<16x32xbf16, #tpu.memory_space<vmem>>, vector<16x32xbf16>
    %1 = arith.extf %0 : vector<16x32xbf16> to vector<16x32xf32>
    %2 = arith.truncf %1 : vector<16x32xf32> to vector<16x32xbf16>
    %c0_1 = arith.constant 0 : index
    %c0_2 = arith.constant 0 : index
    %3 = vector.load %arg2[%c0_1, %c0_2] : memref<32x64xbf16, #tpu.memory_space<vmem>>, vector<32x64xbf16>
    %cst = arith.constant dense<0.000000e+00> : vector<16x64xf32>
    %4 = tpu.matmul %2, %3, %cst {dimension_numbers = #tpu.dot_dimension_numbers<[1], [0], [0], [1], [0, 0, 1, 1], [], []>} : vector<16x32xbf16>, vector<32x64xbf16>, vector<16x64xf32> -> vector<16x64xf32>
    %c0_3 = arith.constant 0 : index
    %c0_4 = arith.constant 0 : index
    %5 = vector.load %arg3[%c0_3, %c0_4] : memref<1x64xf32, #tpu.memory_space<vmem>>, vector<1x64xf32>
    %6 = vector.broadcast %5 : vector<1x64xf32> to vector<16x64xf32>
    %7 = arith.addf %4, %6 : vector<16x64xf32>
    %cst_5 = arith.constant 0.000000e+00 : f32
    %8 = vector.broadcast %cst_5 : f32 to vector<16x64xf32>
    %9 = arith.maximumf %7, %8 : vector<16x64xf32>
    %10 = arith.truncf %9 : vector<16x64xf32> to vector<16x64xbf16>
    %c0_6 = arith.constant 0 : index
    %c0_7 = arith.constant 0 : index
    %11 = vector.load %arg4[%c0_6, %c0_7] : memref<64x64xbf16, #tpu.memory_space<vmem>>, vector<64x64xbf16>
    %cst_8 = arith.constant dense<0.000000e+00> : vector<16x64xf32>
    %12 = tpu.matmul %10, %11, %cst_8 {dimension_numbers = #tpu.dot_dimension_numbers<[1], [0], [0], [1], [0, 0, 1, 1], [], []>} : vector<16x64xbf16>, vector<64x64xbf16>, vector<16x64xf32> -> vector<16x64xf32>
    %c0_9 = arith.constant 0 : index
    %c0_10 = arith.constant 0 : index
    %13 = vector.load %arg5[%c0_9, %c0_10] : memref<1x64xf32, #tpu.memory_space<vmem>>, vector<1x64xf32>
    %14 = vector.broadcast %13 : vector<1x64xf32> to vector<16x64xf32>
    %15 = arith.addf %12, %14 : vector<16x64xf32>
    %cst_11 = arith.constant 0.000000e+00 : f32
    %16 = vector.broadcast %cst_11 : f32 to vector<16x64xf32>
    %17 = arith.maximumf %15, %16 : vector<16x64xf32>
    %18 = arith.truncf %17 : vector<16x64xf32> to vector<16x64xbf16>
    %c0_12 = arith.constant 0 : index
    %c0_13 = arith.constant 0 : index
    %19 = vector.load %arg6[%c0_12, %c0_13] : memref<64x128xbf16, #tpu.memory_space<vmem>>, vector<64x128xbf16>
    %cst_14 = arith.constant dense<0.000000e+00> : vector<16x128xf32>
    %20 = tpu.matmul %18, %19, %cst_14 {dimension_numbers = #tpu.dot_dimension_numbers<[1], [0], [0], [1], [0, 0, 1, 1], [], []>} : vector<16x64xbf16>, vector<64x128xbf16>, vector<16x128xf32> -> vector<16x128xf32>
    %c0_15 = arith.constant 0 : index
    %c0_16 = arith.constant 0 : index
    %21 = vector.load %arg7[%c0_15, %c0_16] : memref<1x128xf32, #tpu.memory_space<vmem>>, vector<1x128xf32>
    %22 = vector.broadcast %21 : vector<1x128xf32> to vector<16x128xf32>
    %23 = arith.addf %20, %22 : vector<16x128xf32>
    %c0_17 = arith.constant 0 : index
    %c0_18 = arith.constant 0 : index
    %24 = vector.load %arg8[%c0_17, %c0_18] : memref<16x128xf32, #tpu.memory_space<vmem>>, vector<16x128xf32>
    tpu.vector_store %arg8[%c0_17, %c0_18], %23 {strides = array<i32>} : memref<16x128xf32, #tpu.memory_space<vmem>>, vector<16x128xf32>,
    return
  }
  func.func @transform_0(%arg0: i32) -> (i32, i32) {
    %c0_i32 = arith.constant 0 : i32
    %c0_i32_0 = arith.constant 0 : i32
    return %arg0, %c0_i32 : i32, i32
  }
  func.func @transform_1(%arg0: i32) -> (i32, i32) {
    %c0_i32 = arith.constant 0 : i32
    %c0_i32_0 = arith.constant 0 : i32
    %c0_i32_1 = arith.constant 0 : i32
    return %c0_i32, %c0_i32_0 : i32, i32
  }
  func.func @transform_2(%arg0: i32) -> (i32, i32) {
    %c0_i32 = arith.constant 0 : i32
    %c0_i32_0 = arith.constant 0 : i32
    %c0_i32_1 = arith.constant 0 : i32
    return %c0_i32, %c0_i32_0 : i32, i32
  }
  func.func @transform_3(%arg0: i32) -> (i32, i32) {
    %c0_i32 = arith.constant 0 : i32
    %c0_i32_0 = arith.constant 0 : i32
    %c0_i32_1 = arith.constant 0 : i32
    return %c0_i32, %c0_i32_0 : i32, i32
  }
  func.func @transform_4(%arg0: i32) -> (i32, i32) {
    %c0_i32 = arith.constant 0 : i32
    %c0_i32_0 = arith.constant 0 : i32
    %c0_i32_1 = arith.constant 0 : i32
    return %c0_i32, %c0_i32_0 : i32, i32
  }
  func.func @transform_5(%arg0: i32) -> (i32, i32) {
    %c0_i32 = arith.constant 0 : i32
    %c0_i32_0 = arith.constant 0 : i32
    %c0_i32_1 = arith.constant 0 : i32
    return %c0_i32, %c0_i32_0 : i32, i32
  }
  func.func @transform_6(%arg0: i32) -> (i32, i32) {
    %c0_i32 = arith.constant 0 : i32
    %c0_i32_0 = arith.constant 0 : i32
    %c0_i32_1 = arith.constant 0 : i32
    return %c0_i32, %c0_i32_0 : i32, i32
  }
  func.func @transform_7(%arg0: i32) -> (i32, i32) {
    %c0_i32 = arith.constant 0 : i32
    %c0_i32_0 = arith.constant 0 : i32
    return %arg0, %c0_i32 : i32, i32
  }
}

</mosaic_0001>

<llo_original>
// kernel: tpu_custom_call.1
$region0: #{tpu_custom_call.1}
  #allocation0 [shape = 'u32[]', space=smem, size = 0x4, offset = 0x4, fixed_abs, tag = 'smem constant byte address 0x4 - core index']
  #allocation1 [shape = 'u32[144,128]{1,0:T(1,128)}', space=vmem, size = 0x12000, scoped, tag = 'internal scratch']
  %s0 = inlined_call_operand.hbm [shape: bf16[16,32], index: 0, kind: input, shape index: {}]
  %s1 = inlined_call_operand.hbm [shape: bf16[32,64], index: 1, kind: input, shape index: {}]
  %s2 = inlined_call_operand.vmem [shape: f32[1,64], index: 2, kind: input, shape index: {}]
  %s3 = inlined_call_operand.hbm [shape: bf16[64,64], index: 3, kind: input, shape index: {}]
  %s4 = inlined_call_operand.vmem [shape: f32[1,64], index: 4, kind: input, shape index: {}]
  %s5 = inlined_call_operand.hbm [shape: bf16[64,128], index: 5, kind: input, shape index: {}]
  %s6 = inlined_call_operand.vmem [shape: f32[1,128], index: 6, kind: input, shape index: {}]
  %s7 = inlined_call_operand.hbm [shape: f32[16,128], index: 7, kind: output, shape index: {}]
  %s8 = sld [smem:[#allocation0]]
  $region54: #{tpu_custom_call.1} parent=0
    _
  %s10 = ssub.s32 1, %s8
  %s11 = scalar_select 0, %s10, %s8
  $region1: #{tpu_custom_call.1} parent=0
    #allocation2 [shape = 'u8[4096]{0}', space=vmem, size = 0x1000, scoped, tag = 'input window, operand 0, single buffered']
    #allocation3 [shape = 's32[1]{0}', space=sflag, size = 0x4, scoped, tag = 'scoped memory for tpu_custom_call.1']
    #allocation4 [shape = 's32[1]{0}', space=sflag, size = 0x4, scoped, tag = 'scoped memory for tpu_custom_call.1']
    #allocation5 [shape = 'u8[8192]{0}', space=vmem, size = 0x2000, scoped, tag = 'input window, operand 1, single buffered']
    #allocation6 [shape = 's32[1]{0}', space=sflag, size = 0x4, scoped, tag = 'scoped memory for tpu_custom_call.1']
    #allocation7 [shape = 'u8[16384]{0}', space=vmem, size = 0x4000, scoped, tag = 'input window, operand 3, single buffered']
    #allocation8 [shape = 'u8[16384]{0}', space=vmem, size = 0x4000, scoped, tag = 'input window, operand 5, single buffered']
    #allocation9 [shape = 's32[1]{0}', space=sflag, size = 0x4, scoped, tag = 'scoped memory for tpu_custom_call.1']
    #allocation10 [shape = 'u8[8192]{0}', space=vmem, size = 0x2000, scoped, tag = 'output window, operand 0, single buffered']
    %12 = vsyncpa [#allocation3], 0
    %13 = vsyncpa [#allocation6], 0
    %14 = vsyncpa [#allocation9], 0
    %15 = vsyncpa [#allocation4], 0
    // Predicated region
    $region2: #{tpu_custom_call.1} parent=1 // pred_check
      _
    $region3: #{tpu_custom_call.1} parent=1 // pred_check_branch
      %17 = sbr.rel (0) target = $region5
    $region4: #{tpu_custom_call.1} parent=1 // pred_region
      %s19 = ssub.s32 128, 128
      %20 = vsyncadd [#allocation3], %s19
      %s21 = sshll.u32 [#allocation2], 4
      %s22 = int_to_ptr.vmem [resolvable:$true] %s21
      %27 = dma.hbm_to_vmem [thread:$0]  %s0, 128, %s22, [#allocation3], 64, 64, 4
    $region5: #{tpu_custom_call.1} parent=1 // pred_fallthru
      _
    // Predicated region
    $region6: #{tpu_custom_call.1} parent=1 // pred_check
      _
    $region7: #{tpu_custom_call.1} parent=1 // pred_check_branch
      %29 = sbr.rel (0) target = $region9
    $region8: #{tpu_custom_call.1} parent=1 // pred_region
      %s31 = ssub.s32 256, 256
      %32 = vsyncadd [#allocation6], %s31
      %s33 = sshll.u32 [#allocation5], 4
      %s34 = int_to_ptr.vmem [resolvable:$true] %s33
      %39 = dma.hbm_to_vmem [thread:$0]  %s1, 256, %s34, [#allocation6], 64, 64, 4
    $region9: #{tpu_custom_call.1} parent=1 // pred_fallthru
      _
    // Predicated region
    $region10: #{tpu_custom_call.1} parent=1 // pred_check
      _
    $region11: #{tpu_custom_call.1} parent=1 // pred_check_branch
      %41 = sbr.rel (0) target = $region13
    $region12: #{tpu_custom_call.1} parent=1 // pred_region
      _
    $region13: #{tpu_custom_call.1} parent=1 // pred_fallthru
      _
    // Predicated region
    $region14: #{tpu_custom_call.1} parent=1 // pred_check
      _
    $region15: #{tpu_custom_call.1} parent=1 // pred_check_branch
      %43 = sbr.rel (0) target = $region17
    $region16: #{tpu_custom_call.1} parent=1 // pred_region
      %s45 = ssub.s32 512, 512
      %46 = vsyncadd [#allocation6], %s45
      %s47 = sshll.u32 [#allocation7], 4
      %s48 = int_to_ptr.vmem [resolvable:$true] %s47
      %53 = dma.hbm_to_vmem [thread:$0]  %s3, 512, %s48, [#allocation6], 64, 64, 4
    $region17: #{tpu_custom_call.1} parent=1 // pred_fallthru
      _
    // Predicated region
    $region18: #{tpu_custom_call.1} parent=1 // pred_check
      _
    $region19: #{tpu_custom_call.1} parent=1 // pred_check_branch
      %55 = sbr.rel (0) target = $region21
    $region20: #{tpu_custom_call.1} parent=1 // pred_region
      _
    $region21: #{tpu_custom_call.1} parent=1 // pred_fallthru
      _
    // Predicated region
    $region22: #{tpu_custom_call.1} parent=1 // pred_check
      _
    $region23: #{tpu_custom_call.1} parent=1 // pred_check_branch
      %57 = sbr.rel (0) target = $region25
    $region24: #{tpu_custom_call.1} parent=1 // pred_region
      %s59 = ssub.s32 512, 512
      %60 = vsyncadd [#allocation9], %s59
      %s61 = sshll.u32 [#allocation8], 4
      %s62 = int_to_ptr.vmem [resolvable:$true] %s61
      %67 = dma.hbm_to_vmem [thread:$0]  %s5, 512, %s62, [#allocation9], 64, 64, 4
    $region25: #{tpu_custom_call.1} parent=1 // pred_fallthru
      _
    // Predicated region
    $region26: #{tpu_custom_call.1} parent=1 // pred_check
      _
    $region27: #{tpu_custom_call.1} parent=1 // pred_check_branch
      %69 = sbr.rel (0) target = $region29
    $region28: #{tpu_custom_call.1} parent=1 // pred_region
      _
    $region29: #{tpu_custom_call.1} parent=1 // pred_fallthru
      _
    // Predicated region
    $region30: #{tpu_custom_call.1} parent=1 // pred_check
      _
    $region31: #{tpu_custom_call.1} parent=1 // pred_check_branch
      %71 = sbr.rel (0) target = $region33
    $region32: #{tpu_custom_call.1} parent=1 // pred_region
      %72 = dma.done [#allocation3], 128
    $region33: #{tpu_custom_call.1} parent=1 // pred_fallthru
      _
    // Predicated region
    $region34: #{tpu_custom_call.1} parent=1 // pred_check
      _
    $region35: #{tpu_custom_call.1} parent=1 // pred_check_branch
      %74 = sbr.rel (0) target = $region37
    $region36: #{tpu_custom_call.1} parent=1 // pred_region
      %75 = dma.done [#allocation6], 256
    $region37: #{tpu_custom_call.1} parent=1 // pred_fallthru
      _
    // Predicated region
    $region38: #{tpu_custom_call.1} parent=1 // pred_check
      _
    $region39: #{tpu_custom_call.1} parent=1 // pred_check_branch
      %77 = sbr.rel (0) target = $region41
    $region40: #{tpu_custom_call.1} parent=1 // pred_region
      %78 = dma.done [#allocation6], 512
    $region41: #{tpu_custom_call.1} parent=1 // pred_fallthru
      _
    // Predicated region
    $region42: #{tpu_custom_call.1} parent=1 // pred_check
      _
    $region43: #{tpu_custom_call.1} parent=1 // pred_check_branch
      %80 = sbr.rel (0) target = $region45
    $region44: #{tpu_custom_call.1} parent=1 // pred_region
      %81 = dma.done [#allocation9], 512
    $region45: #{tpu_custom_call.1} parent=1 // pred_fallthru
      _
    %v83 = vld [vmem:[#allocation2] sm:$0xf]
    %v84 = vld [vmem:[#allocation2 + $0x4] sm:$0xf]
    %v85 = vld [vmem:[#allocation5] sm:$0xf]
    %v86 = vld [vmem:[#allocation5 + $0x4] sm:$0xf]
    %v87 = vld [vmem:[#allocation5 + $0x8] sm:$0xf]
    %v88 = vld [vmem:[#allocation5 + $0xc] sm:$0xf]
    %v89 = vld [vmem:[%s2] sm:$0x1]
    %v91 = vlaneseq
    %v92 = vshrl.u32 %v91, 7
    %v93 = vsub.s32 0, %v92
    %v94 = vrot.slane %v89, %v93
    %v98 = vunpack.c.l.b16 %v83
    %v99 = vunpack.c.l.b16 %v84
    %v100 = vpack.c.b16 %v99, %v98
    %v105 = vunpack.c.l.b16 %v85
    %v106 = vunpack.c.l.b16 %v86
    %v107 = vunpack.c.l.b16 %v87
    %v108 = vunpack.c.l.b16 %v88
    %v109 = vpack.c.b16 %v106, %v105
    %v110 = vpack.c.b16 %v108, %v107
    %vm113 = vcmask 261120
    %v115 = vsel %vm113, %v100, 0
    %117 = vmatprep.subr.bf16.mxu0 0
    %118 = vmatpush1.bf16.msra.mxu0 %v109
    %119 = vmatprep.subr.bf16.mxu0 0
    %120 = vmatpush1.bf16.msra.mxu0 %v110
    %121 = vmatprep.subr.bf16.mxu0 0
    %122 = vmatpush1.bf16.msra.mxu0 0
    %123 = vmatprep.subr.bf16.mxu0 0
    %124 = vmatpush1.bf16.msra.mxu0 0
    %125 = vmatprep.subr.bf16.mxu0 0
    %126 = vmatpush1.bf16.msra.mxu0 0
    %127 = vmatprep.subr.bf16.mxu0 0
    %128 = vmatpush1.bf16.msra.mxu0 0
    %129 = vmatprep.subr.bf16.mxu0 0
    %130 = vmatpush1.bf16.msra.mxu0 0
    %131 = vmatprep.subr.bf16.mxu0 0
    %132 = vmatpush1.bf16.msra.mxu0 0
    %133 = vmatprep.subr.bf16.mxu0 0
    %134 = vmatpush1.bf16.msra.mxu0 0
    %135 = vmatprep.subr.bf16.mxu0 0
    %136 = vmatpush1.bf16.msra.mxu0 0
    %137 = vmatprep.subr.bf16.mxu0 0
    %138 = vmatpush1.bf16.msra.mxu0 0
    %139 = vmatprep.subr.bf16.mxu0 0
    %140 = vmatpush1.bf16.msra.mxu0 0
    %141 = vmatprep.subr.bf16.mxu0 0
    %142 = vmatpush1.bf16.msra.mxu0 0
    %143 = vmatprep.subr.bf16.mxu0 0
    %144 = vmatpush1.bf16.msra.mxu0 0
    %145 = vmatprep.subr.bf16.mxu0 0
    %146 = vmatpush1.bf16.msra.mxu0 0
    %147 = vmatprep.subr.bf16.mxu0 0
    %148 = vmatpush1.bf16.msra.mxu0 0
    %149 = vmatprep.mubr.bf16.mxu0 0
    %150 = vmatmul.mubr.bf16.gmra.mrb[0].mxu0 %v115
    %v151 = vpop.f32.mrb[0].mxu0
    %v152 = vadd.f32 %v94, %v151
    %v153 = vpop.f32.mrb[0].mxu0
    %v154 = vpop.f32.mrb[0].mxu0
    %v155 = vadd.f32 %v94, %v154
    %v156 = vpop.f32.mrb[0].mxu0
    %157 = vdwg.mxu0
    %v158 = vmax.f32 %v152, 0.0
    %v159 = vmax.f32 %v155, 0.0
    %v160 = vpack.c.bf16 %v159, %v158
    %v161 = vld [vmem:[#allocation7] sm:$0xf]
    %v162 = vld [vmem:[#allocation7 + $0x4] sm:$0xf]
    %v163 = vld [vmem:[#allocation7 + $0x8] sm:$0xf]
    %v164 = vld [vmem:[#allocation7 + $0xc] sm:$0xf]
    %v165 = vld [vmem:[#allocation7 + $0x10] sm:$0xf]
    %v166 = vld [vmem:[#allocation7 + $0x14] sm:$0xf]
    %v167 = vld [vmem:[#allocation7 + $0x18] sm:$0xf]
    %v168 = vld [vmem:[#allocation7 + $0x1c] sm:$0xf]
    %v169 = vld [vmem:[%s4] sm:$0x1]
    %v171 = vlaneseq
    %v172 = vshrl.u32 %v171, 7
    %v173 = vsub.s32 0, %v172
    %v174 = vrot.slane %v169, %v173
    %v184 = vunpack.c.l.b16 %v161
    %v185 = vunpack.c.l.b16 %v162
    %v186 = vunpack.c.l.b16 %v163
    %v187 = vunpack.c.l.b16 %v164
    %v188 = vunpack.c.l.b16 %v165
    %v189 = vunpack.c.l.b16 %v166
    %v190 = vunpack.c.l.b16 %v167
    %v191 = vunpack.c.l.b16 %v168
    %v192 = vpack.c.b16 %v185, %v184
    %v193 = vpack.c.b16 %v187, %v186
    %v194 = vpack.c.b16 %v189, %v188
    %v195 = vpack.c.b16 %v191, %v190
    %vm200 = vcmask 523264
    %v202 = vsel %vm200, %v160, 0
    %204 = vmatprep.subr.bf16.mxu0 0
    %205 = vmatpush1.bf16.msra.mxu0 %v192
    %206 = vmatprep.subr.bf16.mxu0 0
    %207 = vmatpush1.bf16.msra.mxu0 %v193
    %208 = vmatprep.subr.bf16.mxu0 0
    %209 = vmatpush1.bf16.msra.mxu0 %v194
    %210 = vmatprep.subr.bf16.mxu0 0
    %211 = vmatpush1.bf16.msra.mxu0 %v195
    %212 = vmatprep.subr.bf16.mxu0 0
    %213 = vmatpush1.bf16.msra.mxu0 0
    %214 = vmatprep.subr.bf16.mxu0 0
    %215 = vmatpush1.bf16.msra.mxu0 0
    %216 = vmatprep.subr.bf16.mxu0 0
    %217 = vmatpush1.bf16.msra.mxu0 0
    %218 = vmatprep.subr.bf16.mxu0 0
    %219 = vmatpush1.bf16.msra.mxu0 0
    %220 = vmatprep.subr.bf16.mxu0 0
    %221 = vmatpush1.bf16.msra.mxu0 0
    %222 = vmatprep.subr.bf16.mxu0 0
    %223 = vmatpush1.bf16.msra.mxu0 0
    %224 = vmatprep.subr.bf16.mxu0 0
    %225 = vmatpush1.bf16.msra.mxu0 0
    %226 = vmatprep.subr.bf16.mxu0 0
    %227 = vmatpush1.bf16.msra.mxu0 0
    %228 = vmatprep.subr.bf16.mxu0 0
    %229 = vmatpush1.bf16.msra.mxu0 0
    %230 = vmatprep.subr.bf16.mxu0 0
    %231 = vmatpush1.bf16.msra.mxu0 0
    %232 = vmatprep.subr.bf16.mxu0 0
    %233 = vmatpush1.bf16.msra.mxu0 0
    %234 = vmatprep.subr.bf16.mxu0 0
    %235 = vmatpush1.bf16.msra.mxu0 0
    %236 = vmatprep.mubr.bf16.mxu0 0
    %237 = vmatmul.mubr.bf16.gmra.mrb[0].mxu0 %v202
    %v238 = vpop.f32.mrb[0].mxu0
    %v239 = vadd.f32 %v174, %v238
    %v240 = vpop.f32.mrb[0].mxu0
    %v241 = vpop.f32.mrb[0].mxu0
    %v242 = vadd.f32 %v174, %v241
    %v243 = vpop.f32.mrb[0].mxu0
    %244 = vdwg.mxu0
    %v245 = vmax.f32 %v239, 0.0
    %v246 = vmax.f32 %v242, 0.0
    %v247 = vpack.c.bf16 %v246, %v245
    %v248 = vld [vmem:[#allocation8] sm:$0xf]
    %v249 = vld [vmem:[#allocation8 + $0x4] sm:$0xf]
    %v250 = vld [vmem:[#allocation8 + $0x8] sm:$0xf]
    %v251 = vld [vmem:[#allocation8 + $0xc] sm:$0xf]
    %v252 = vld [vmem:[#allocation8 + $0x10] sm:$0xf]
    %v253 = vld [vmem:[#allocation8 + $0x14] sm:$0xf]
    %v254 = vld [vmem:[#allocation8 + $0x18] sm:$0xf]
    %v255 = vld [vmem:[#allocation8 + $0x1c] sm:$0xf]
    %v256 = vld [vmem:[%s6] sm:$0x1]
    %v258 = vlaneseq
    %v259 = vshrl.u32 %v258, 7
    %v260 = vsub.s32 0, %v259
    %v261 = vrot.slane %v256, %v260
    %v271 = vunpack.c.l.b16 %v248
    %v272 = vunpack.c.l.b16 %v249
    %v273 = vunpack.c.l.b16 %v250
    %v274 = vunpack.c.l.b16 %v251
    %v275 = vunpack.c.l.b16 %v252
    %v276 = vunpack.c.l.b16 %v253
    %v277 = vunpack.c.l.b16 %v254
    %v278 = vunpack.c.l.b16 %v255
    %v279 = vpack.c.b16 %v272, %v271
    %v280 = vpack.c.b16 %v274, %v273
    %v281 = vpack.c.b16 %v276, %v275
    %v282 = vpack.c.b16 %v278, %v277
    %v288 = vsel %vm200, %v247, 0
    %290 = vmatprep.subr.bf16.mxu0 0
    %291 = vmatpush1.bf16.msra.mxu0 %v279
    %292 = vmatprep.subr.bf16.mxu0 0
    %293 = vmatpush1.bf16.msra.mxu0 %v280
    %294 = vmatprep.subr.bf16.mxu0 0
    %295 = vmatpush1.bf16.msra.mxu0 %v281
    %296 = vmatprep.subr.bf16.mxu0 0
    %297 = vmatpush1.bf16.msra.mxu0 %v282
    %298 = vmatprep.subr.bf16.mxu0 0
    %299 = vmatpush1.bf16.msra.mxu0 0
    %300 = vmatprep.subr.bf16.mxu0 0
    %301 = vmatpush1.bf16.msra.mxu0 0
    %302 = vmatprep.subr.bf16.mxu0 0
    %303 = vmatpush1.bf16.msra.mxu0 0
    %304 = vmatprep.subr.bf16.mxu0 0
    %305 = vmatpush1.bf16.msra.mxu0 0
    %306 = vmatprep.subr.bf16.mxu0 0
    %307 = vmatpush1.bf16.msra.mxu0 0
    %308 = vmatprep.subr.bf16.mxu0 0
    %309 = vmatpush1.bf16.msra.mxu0 0
    %310 = vmatprep.subr.bf16.mxu0 0
    %311 = vmatpush1.bf16.msra.mxu0 0
    %312 = vmatprep.subr.bf16.mxu0 0
    %313 = vmatpush1.bf16.msra.mxu0 0
    %314 = vmatprep.subr.bf16.mxu0 0
    %315 = vmatpush1.bf16.msra.mxu0 0
    %316 = vmatprep.subr.bf16.mxu0 0
    %317 = vmatpush1.bf16.msra.mxu0 0
    %318 = vmatprep.subr.bf16.mxu0 0
    %319 = vmatpush1.bf16.msra.mxu0 0
    %320 = vmatprep.subr.bf16.mxu0 0
    %321 = vmatpush1.bf16.msra.mxu0 0
    %322 = vmatprep.mubr.bf16.mxu0 0
    %323 = vmatmul.mubr.bf16.gmra.mrb[0].mxu0 %v288
    %v324 = vpop.f32.mrb[0].mxu0
    %v325 = vadd.f32 %v261, %v324
    %v326 = vpop.f32.mrb[0].mxu0
    %v327 = vpop.f32.mrb[0].mxu0
    %v328 = vadd.f32 %v261, %v327
    %v329 = vpop.f32.mrb[0].mxu0
    %330 = vdwg.mxu0
    %331 = vst [vmem:[#allocation10] sm:$0xff] %v325
    %332 = vst [vmem:[#allocation10 + $0x8] sm:$0xff] %v328
    // Predicated region
    $region46: #{tpu_custom_call.1} parent=1 // pred_check
      _
    $region47: #{tpu_custom_call.1} parent=1 // pred_check_branch
      %334 = sbr.rel (0) target = $region49
    $region48: #{tpu_custom_call.1} parent=1 // pred_region
      %s336 = ssub.s32 256, 256
      %337 = vsyncadd [#allocation4], %s336
      %s338 = sshll.u32 [#allocation10], 4
      %s339 = int_to_ptr.vmem [resolvable:$true] %s338
      %344 = dma.vmem_to_hbm [thread:$0]  %s339, 256, %s7, [#allocation4], 128, 128, 8
    $region49: #{tpu_custom_call.1} parent=1 // pred_fallthru
      _
    // Predicated region
    $region50: #{tpu_custom_call.1} parent=1 // pred_check
      _
    $region51: #{tpu_custom_call.1} parent=1 // pred_check_branch
      %346 = sbr.rel (0) target = $region53
    $region52: #{tpu_custom_call.1} parent=1 // pred_region
      %347 = dma.done [#allocation4], 256
    $region53: #{tpu_custom_call.1} parent=1 // pred_fallthru
      _
    %348 = vsyncpa [#allocation3], 1
    %349 = vsyncpa [#allocation6], 1
    %350 = vsyncpa [#allocation9], 1
    %351 = vsyncpa [#allocation4], 1

</llo_original>
